<compile_context>
chip_gen: v7x
topology: tpu7x:2x2x1
jax: 0.10.0
libtpu: 0.0.40
codegen_flags: <defaults>
</compile_context>

<pallas_src>
import functools

import jax
import jax.numpy as jnp
from jax.experimental import pallas as pl
from jax.experimental.pallas import tpu as pltpu

_LANES = 128  # TPU lane width


# ---------------------------------------------------------------------------
# In-kernel helpers
# ---------------------------------------------------------------------------
def _mlp_head(pooled_avg, pooled_max, w1_ref, w2_ref, out_dtype):
    """sigmoid(fc2(relu(fc1(avg))) + fc2(relu(fc1(max)))) with both branches fused
    into a single (Cr,C)x(C,2) and (C,Cr)x(Cr,2) matmul pair."""
    col = jax.lax.broadcasted_iota(jnp.int32, (1, 2), 1)          # [[0, 1]]
    pooled = jnp.where(col == 0, pooled_avg, pooled_max)           # (C, 2)
    h = jnp.dot(w1_ref[...], pooled, preferred_element_type=jnp.float32)
    h = jnp.maximum(h, 0.0)                                        # (Cr, 2) relu
    y = jnp.dot(w2_ref[...], h, preferred_element_type=jnp.float32)  # (C, 2)
    return jax.nn.sigmoid(y[:, 0:1] + y[:, 1:2]).astype(out_dtype)   # (C, 1)


def _accumulate_tile(x_ref, sum_acc, max_acc, base, *, hw, lane_tiles, masked):
    """Fold one lane-dense (C, T) spatial tile into (C, 128) running sum / max.

    Static 128-lane ref slices + elementwise VALU add/max keep the per-step work off
    the XLU and hidden under the tile DMA. `base` is the global element offset of
    this tile; when `masked`, out-of-range lanes contribute 0 (sum) / -inf (max).
    """
    s_acc = sum_acc[...]
    m_acc = max_acc[...]
    for j in range(lane_tiles):
        chunk = x_ref[0, :, j * _LANES:(j + 1) * _LANES].astype(jnp.float32)  # (C, 128)
        if masked:
            idx = base + j * _LANES + jax.lax.broadcasted_iota(jnp.int32, (1, _LANES), 1)
            valid = idx < hw
            s_acc = s_acc + jnp.where(valid, chunk, 0.0)
            m_acc = jnp.maximum(m_acc, jnp.where(valid, chunk, -jnp.inf))
        else:
            s_acc = s_acc + chunk
            m_acc = jnp.maximum(m_acc, chunk)
    sum_acc[...] = s_acc
    max_acc[...] = m_acc


# ---------------------------------------------------------------------------
# Kernels
# ---------------------------------------------------------------------------
def _fused_kernel(x_ref, w1_ref, w2_ref, o_ref, *scratch,
                  inv_hw, hw, tile, lane_tiles, masked, single_tile):
    """grid = (B, ns). Streams spatial tiles, pools, runs the shared MLP in-kernel."""
    if single_tile:
        # Whole HW fits in one block: one step per batch, plain XLU reductions.
        x = x_ref[0].astype(jnp.float32)                       # (C, HW)
        total = jnp.sum(x, axis=-1, keepdims=True)             # (C, 1)
        mx = jnp.max(x, axis=-1, keepdims=True)                # (C, 1)
        o_ref[0] = _mlp_head(total * inv_hw, mx, w1_ref, w2_ref, o_ref.dtype)
        return

    sum_acc, max_acc = scratch
    s = pl.program_id(1)

    @pl.when(s == 0)
    def _init():
        sum_acc[...] = jnp.zeros_like(sum_acc)
        max_acc[...] = jnp.full_like(max_acc, -jnp.inf)

    _accumulate_tile(x_ref, sum_acc, max_acc, s * tile,
                     hw=hw, lane_tiles=lane_tiles, masked=masked)

    @pl.when(s == pl.num_programs(1) - 1)
    def _finalize():
        total = jnp.sum(sum_acc[...], axis=-1, keepdims=True)  # (C, 1)
        mx = jnp.max(max_acc[...], axis=-1, keepdims=True)     # (C, 1)
        o_ref[0] = _mlp_head(total * inv_hw, mx, w1_ref, w2_ref, o_ref.dtype)


def _partial_kernel(x_ref, psum_ref, pmax_ref, sum_acc, max_acc,
                    *, hw, tile, lane_tiles, ns_chunk, masked):
    """grid = (B, NC, ns_chunk), chunk axis 'parallel' (dual TensorCore on v7x).
    Emits per-(batch, chunk) partial (sum, max); combine + MLP happen outside."""
    c = pl.program_id(1)
    s = pl.program_id(2)

    @pl.when(s == 0)
    def _init():
        sum_acc[...] = jnp.zeros_like(sum_acc)
        max_acc[...] = jnp.full_like(max_acc, -jnp.inf)

    base = (c * ns_chunk + s) * tile
    _accumulate_tile(x_ref, sum_acc, max_acc, base,
                     hw=hw, lane_tiles=lane_tiles, masked=masked)

    @pl.when(s == pl.num_programs(2) - 1)
    def _emit():
        psum_ref[0, 0] = jnp.sum(sum_acc[...], axis=-1, keepdims=True)
        pmax_ref[0, 0] = jnp.max(max_acc[...], axis=-1, keepdims=True)


# ---------------------------------------------------------------------------
# Tiling plan
# ---------------------------------------------------------------------------
def _tile_plan(hw, c, itemsize, tile_budget_bytes):
    """Pick the spatial tile from a VMEM budget (2-8 MiB class blocks, <= 16 MiB cap
    so double-buffering stays well inside v7x's 64 MiB / v5e's scoped default)."""
    budget = min(max(int(tile_budget_bytes), c * itemsize * _LANES), 16 << 20)
    budget_lane_tiles = min(max(1, budget // (c * itemsize * _LANES)), 256)
    needed_lane_tiles = pl.cdiv(hw, _LANES)
    if needed_lane_tiles <= budget_lane_tiles:
        # Everything fits in a single full-extent block (also covers HW % 128 != 0).
        return {"single": True, "tile": hw, "ns": 1, "lane_tiles": 0, "masked": False}
    tile = budget_lane_tiles * _LANES
    ns = pl.cdiv(hw, tile)
    return {"single": False, "tile": tile, "ns": ns,
            "lane_tiles": budget_lane_tiles, "masked": (hw % tile != 0)}


# ---------------------------------------------------------------------------
# Public wrapper
# ---------------------------------------------------------------------------
def channel_attention_pallas(x_nchw, w1, w2, *, tile_budget_bytes=4 << 20,
                             split_spatial=None):
    """ChannelAttention forward.

    x_nchw: (B, C, H, W) f32 or bf16 (bf16 halves HBM traffic; accumulation is f32)
    w1:     (C//16, C)   fc1 weight (Conv2d 1x1, bias=False, squeezed)
    w2:     (C, C//16)   fc2 weight (Conv2d 1x1, bias=False, squeezed)
    returns (B, C, 1, 1) = sigmoid(MLP(avgpool(x)) + MLP(maxpool(x)))
    """
    B, C, H, W = x_nchw.shape
    HW = H * W
    Cr = w1.shape[0]
    assert w1.shape == (Cr, C) and w2.shape == (C, Cr)

    x = x_nchw.reshape(B, C, HW)                 # free reshape, HW on the lane axis
    w1 = jnp.asarray(w1, jnp.float32)
    w2 = jnp.asarray(w2, jnp.float32)
    itemsize = x.dtype.itemsize

    plan = _tile_plan(HW, C, itemsize, tile_budget_bytes)
    T, ns = plan["tile"], plan["ns"]

    if split_spatial is None:
        # v7x has 2 TensorCores; a B=1 HBM-bound reduction must split spatially to use both.
        split_spatial = (B == 1 and ns >= 2)
    split_spatial = bool(split_spatial) and ns >= 2

    # Advisory cost: bandwidth-heavy, FLOP-cheap.
    w_bytes = (w1.size + w2.size) * 4
    cost = pl.CostEstimate(
        flops=3 * B * C * HW + 8 * B * C * Cr,
        transcendentals=B * C,
        bytes_accessed=B * C * HW * itemsize + w_bytes + B * C * 4,
    )

    block_bytes = C * T * itemsize
    scratch_bytes = 2 * C * _LANES * 4
    vmem_needed = 2 * block_bytes + 2 * w_bytes + scratch_bytes + (1 << 20)
    vmem_limit = int(min(max(2 * vmem_needed, 16 << 20), 48 << 20))

    if not split_spatial:
        kernel = functools.partial(
            _fused_kernel, inv_hw=1.0 / HW, hw=HW, tile=T,
            lane_tiles=plan["lane_tiles"], masked=plan["masked"],
            single_tile=plan["single"])
        scratch = [] if plan["single"] else [pltpu.VMEM((C, _LANES), jnp.float32),
                                             pltpu.VMEM((C, _LANES), jnp.float32)]
        out = pl.pallas_call(
            kernel,
            out_shape=jax.ShapeDtypeStruct((B, C, 1), x.dtype),
            grid_spec=pltpu.PrefetchScalarGridSpec(
                num_scalar_prefetch=0,
                grid=(B, ns),                                    # reduction axis last
                in_specs=[
                    pl.BlockSpec((1, C, T), lambda b, s: (b, 0, s)),   # streamed tiles
                    pl.BlockSpec((Cr, C), lambda b, s: (0, 0)),        # fc1 (VMEM-resident)
                    pl.BlockSpec((C, Cr), lambda b, s: (0, 0)),        # fc2 (VMEM-resident)
                ],
                out_specs=pl.BlockSpec((1, C, 1), lambda b, s: (b, 0, 0)),
                scratch_shapes=scratch,
            ),
            compiler_params=pltpu.CompilerParams(
                dimension_semantics=("parallel", "arbitrary"),
                vmem_limit_bytes=vmem_limit,
            ),
            cost_estimate=cost,
        )(x, w1, w2)
        return out.reshape(B, C, 1, 1)

    # ---- split path: 2 parallel spatial chunks (dual-TC on v7x), partial outputs ----
    NC = 2
    ns_total = ns
    ns_chunk = pl.cdiv(ns_total, NC)
    masked = (NC * ns_chunk * T != HW)  # ragged tail and/or padded chunk grid

    def x_map(b, c, s):
        # Clamp padded (fully out-of-range) tiles onto the last valid tile; the lane
        # mask (nominal index >= HW) zeroes their contribution.
        return (b, 0, jnp.minimum(c * ns_chunk + s, ns_total - 1))

    kernel = functools.partial(
        _partial_kernel, hw=HW, tile=T, lane_tiles=plan["lane_tiles"],
        ns_chunk=ns_chunk, masked=masked)

    psum, pmax = pl.pallas_call(
        kernel,
        out_shape=(jax.ShapeDtypeStruct((B, NC, C, 1), jnp.float32),
                   jax.ShapeDtypeStruct((B, NC, C, 1), jnp.float32)),
        grid_spec=pltpu.PrefetchScalarGridSpec(
            num_scalar_prefetch=0,
            grid=(B, NC, ns_chunk),
            in_specs=[pl.BlockSpec((1, C, T), x_map)],
            out_specs=[
                pl.BlockSpec((1, 1, C, 1), lambda b, c, s: (b, c, 0, 0)),
                pl.BlockSpec((1, 1, C, 1), lambda b, c, s: (b, c, 0, 0)),
            ],
            scratch_shapes=[pltpu.VMEM((C, _LANES), jnp.float32),
                            pltpu.VMEM((C, _LANES), jnp.float32)],
        ),
        compiler_params=pltpu.CompilerParams(
            dimension_semantics=("parallel", "parallel", "arbitrary"),
            vmem_limit_bytes=vmem_limit,
        ),
        cost_estimate=cost,
    )(x)

    # Tiny O(B*C) combine + shared MLP + sigmoid epilogue (per review: plain JAX is fine).
    avg = jnp.sum(psum, axis=1)[..., 0] / HW    # (B, C)
    mx = jnp.max(pmax, axis=1)[..., 0]          # (B, C)

    def mlp(z):
        return jax.nn.relu(z @ w1.T) @ w2.T

    out = jax.nn.sigmoid(mlp(avg) + mlp(mx)).astype(x.dtype)
    return out.reshape(B, C, 1, 1)


# ---------------------------------------------------------------------------
# Pure-JAX reference (mirrors the PyTorch forward)
# ---------------------------------------------------------------------------
def channel_attention_reference(x, w1, w2):
    x = x.astype(jnp.float32)
    avg = jnp.mean(x, axis=(2, 3))  # (B, C)
    mx = jnp.max(x, axis=(2, 3))    # (B, C)

    def mlp(z):
        return jax.nn.relu(z @ w1.T) @ w2.T

    out = jax.nn.sigmoid(mlp(avg) + mlp(mx))
    return out[:, :, None, None]


if __name__ == "__main__":
    # in_planes=32 -> hardcoded //16 bottleneck gives Cr=2 (matches the module).
    B, C, H, W = 2, 32, 16, 16
    Cr = C // 16

    key = jax.random.PRNGKey(0)
    kx, k1, k2, kx2, kx3 = jax.random.split(key, 5)

    x = jax.random.normal(kx, (B, C, H, W), dtype=jnp.float32)
    w1 = jax.random.normal(k1, (Cr, C), dtype=jnp.float32) * 0.1  # fc1.weight squeezed
    w2 = jax.random.normal(k2, (C, Cr), dtype=jnp.float32) * 0.1  # fc2.weight squeezed

    # 1) Default path: HW fits a single adaptive tile.
    out = jax.block_until_ready(channel_attention_pallas(x, w1, w2))
    ref = channel_attention_reference(x, w1, w2)
    assert out.shape == (B, C, 1, 1)
    assert jnp.allclose(out, ref, atol=1e-5, rtol=1e-5), float(jnp.max(jnp.abs(out - ref)))

    # 2) Ragged HW (25*25=625) streamed in masked 256-lane tiles (forced small budget).
    x2 = jax.random.normal(kx2, (B, C, 25, 25), dtype=jnp.float32)
    out2 = jax.block_until_ready(
        channel_attention_pallas(x2, w1, w2, tile_budget_bytes=32 * 1024))
    ref2 = channel_attention_reference(x2, w1, w2)
    assert jnp.allclose(out2, ref2, atol=1e-5, rtol=1e-5), float(jnp.max(jnp.abs(out2 - ref2)))

    # 3) B=1 dual-chunk (v7x two-TensorCore) split path, streaming bf16.
    x3 = jax.random.normal(kx3, (1, C, 32, 32), dtype=jnp.float32).astype(jnp.bfloat16)
    out3 = jax.block_until_ready(
        channel_attention_pallas(x3, w1, w2, tile_budget_bytes=32 * 1024))
    ref3 = channel_attention_reference(x3, w1, w2)
    assert jnp.allclose(out3.astype(jnp.float32), ref3, atol=5e-3, rtol=1e-2), \
        float(jnp.max(jnp.abs(out3.astype(jnp.float32) - ref3)))

    print("KERNEL_OK")
</pallas_src>

<mosaic_0001>
module attributes {stable_mosaic.version = 11 : i64} {
  func.func @_fused_kernel(%arg0: i32, %arg1: i32, %arg2: memref<1x32x256xf32, #tpu.memory_space<vmem>>, %arg3: memref<2x32xf32, #tpu.memory_space<vmem>>, %arg4: memref<32x2xf32, #tpu.memory_space<vmem>>, %arg5: memref<1x32x1xf32, #tpu.memory_space<vmem>>) attributes {dimension_semantics = [#tpu.dimension_semantics<parallel>, #tpu.dimension_semantics<arbitrary>], iteration_bounds = array<i64: 2, 1>, scalar_prefetch = 0 : i64, scratch_operands = 0 : i64, tpu.core_type = #tpu.core_type<tc>, window_params = [{transform_indices = @transform_0, window_bounds = array<i64: 1, 32, 256>}, {pipeline_mode = #tpu.pipeline_mode<synchronous>, transform_indices = @transform_1, window_bounds = array<i64: 2, 32>}, {pipeline_mode = #tpu.pipeline_mode<synchronous>, transform_indices = @transform_2, window_bounds = array<i64: 32, 2>}, {transform_indices = @transform_3, window_bounds = array<i64: 1, 32, 1>}]} {
    %c0 = arith.constant 0 : index
    %c0_0 = arith.constant 0 : index
    %c0_1 = arith.constant 0 : index
    %0 = vector.load %arg2[%c0, %c0_0, %c0_1] : memref<1x32x256xf32, #tpu.memory_space<vmem>>, vector<1x32x256xf32>
    %1 = vector.shape_cast %0 : vector<1x32x256xf32> to vector<32x256xf32>
    %cst = arith.constant dense<0.000000e+00> : vector<32xf32>
    %2 = vector.multi_reduction <add>, %1, %cst [1] : vector<32x256xf32> to vector<32xf32>
    %3 = vector.shape_cast %2 : vector<32xf32> to vector<32x1xf32>
    %cst_2 = arith.constant dense<0xFF800000> : vector<32xf32>
    %4 = vector.multi_reduction <maximumf>, %1, %cst_2 [1] : vector<32x256xf32> to vector<32xf32>
    %5 = vector.shape_cast %4 : vector<32xf32> to vector<32x1xf32>
    %cst_3 = arith.constant 3.906250e-03 : f32
    %6 = vector.broadcast %cst_3 : f32 to vector<32x1xf32>
    %7 = arith.mulf %3, %6 : vector<32x1xf32>
    %8 = tpu.iota {dimensions = array<i32: 1>} : vector<1x2xi32>
    %c0_i32 = arith.constant 0 : i32
    %9 = vector.broadcast %c0_i32 : i32 to vector<1x2xi32>
    %10 = arith.cmpi eq, %8, %9 : vector<1x2xi32>
    %11 = vector.shape_cast %10 : vector<1x2xi1> to vector<1x2xi1>
    %12 = vector.broadcast %11 : vector<1x2xi1> to vector<32x2xi1>
    %13 = vector.shape_cast %7 : vector<32x1xf32> to vector<32x1xf32>
    %14 = vector.broadcast %13 : vector<32x1xf32> to vector<32x2xf32>
    %15 = vector.shape_cast %5 : vector<32x1xf32> to vector<32x1xf32>
    %16 = vector.broadcast %15 : vector<32x1xf32> to vector<32x2xf32>
    %17 = arith.select %12, %14, %16 : vector<32x2xi1>, vector<32x2xf32>
    %c0_4 = arith.constant 0 : index
    %c0_5 = arith.constant 0 : index
    %18 = vector.load %arg3[%c0_4, %c0_5] : memref<2x32xf32, #tpu.memory_space<vmem>>, vector<2x32xf32>
    %cst_6 = arith.constant dense<0.000000e+00> : vector<2x2xf32>
    %19 = tpu.matmul %18, %17, %cst_6 {dimension_numbers = #tpu.dot_dimension_numbers<[1], [0], [0], [1], [0, 0, 1, 1], [], []>} : vector<2x32xf32>, vector<32x2xf32>, vector<2x2xf32> -> vector<2x2xf32>
    %cst_7 = arith.constant 0.000000e+00 : f32
    %20 = vector.broadcast %cst_7 : f32 to vector<2x2xf32>
    %21 = arith.maximumf %19, %20 : vector<2x2xf32>
    %c0_8 = arith.constant 0 : index
    %c0_9 = arith.constant 0 : index
    %22 = vector.load %arg4[%c0_8, %c0_9] : memref<32x2xf32, #tpu.memory_space<vmem>>, vector<32x2xf32>
    %cst_10 = arith.constant dense<0.000000e+00> : vector<32x2xf32>
    %23 = tpu.matmul %22, %21, %cst_10 {dimension_numbers = #tpu.dot_dimension_numbers<[1], [0], [0], [1], [0, 0, 1, 1], [], []>} : vector<32x2xf32>, vector<2x2xf32>, vector<32x2xf32> -> vector<32x2xf32>
    %24 = vector.extract_strided_slice %23 {offsets = [0, 0], sizes = [32, 1], strides = [1, 1]} : vector<32x2xf32> to vector<32x1xf32>
    %25 = vector.extract_strided_slice %23 {offsets = [0, 1], sizes = [32, 1], strides = [1, 1]} : vector<32x2xf32> to vector<32x1xf32>
    %26 = arith.addf %24, %25 : vector<32x1xf32>
    %27 = arith.negf %26 : vector<32x1xf32>
    %28 = math.exp %27 : vector<32x1xf32>
    %cst_11 = arith.constant 1.000000e+00 : f32
    %29 = vector.broadcast %cst_11 : f32 to vector<32x1xf32>
    %30 = arith.addf %29, %28 : vector<32x1xf32>
    %31 = arith.divf %29, %30 : vector<32x1xf32>
    %c0_12 = arith.constant 0 : index
    %c0_13 = arith.constant 0 : index
    %c0_14 = arith.constant 0 : index
    %32 = vector.load %arg5[%c0_12, %c0_13, %c0_14] : memref<1x32x1xf32, #tpu.memory_space<vmem>>, vector<1x32x1xf32>
    %33 = vector.shape_cast %32 : vector<1x32x1xf32> to vector<32x1xf32>
    %34 = vector.shape_cast %31 : vector<32x1xf32> to vector<1x32x1xf32>
    tpu.vector_store %arg5[%c0_12, %c0_13, %c0_14], %34 {strides = array<i32>} : memref<1x32x1xf32, #tpu.memory_space<vmem>>, vector<1x32x1xf32>,
    return
  }
  func.func @transform_0(%arg0: i32, %arg1: i32) -> (i32, i32, i32) {
    %c0_i32 = arith.constant 0 : i32
    %c0_i32_0 = arith.constant 0 : i32
    return %arg0, %c0_i32, %arg1 : i32, i32, i32
  }
  func.func @transform_1(%arg0: i32, %arg1: i32) -> (i32, i32) {
    %c0_i32 = arith.constant 0 : i32
    %c0_i32_0 = arith.constant 0 : i32
    %c0_i32_1 = arith.constant 0 : i32
    return %c0_i32, %c0_i32_0 : i32, i32
  }
  func.func @transform_2(%arg0: i32, %arg1: i32) -> (i32, i32) {
    %c0_i32 = arith.constant 0 : i32
    %c0_i32_0 = arith.constant 0 : i32
    %c0_i32_1 = arith.constant 0 : i32
    return %c0_i32, %c0_i32_0 : i32, i32
  }
  func.func @transform_3(%arg0: i32, %arg1: i32) -> (i32, i32, i32) {
    %c0_i32 = arith.constant 0 : i32
    %c0_i32_0 = arith.constant 0 : i32
    %c0_i32_1 = arith.constant 0 : i32
    return %arg0, %c0_i32, %c0_i32_0 : i32, i32, i32
  }
}

</mosaic_0001>

<llo_original>
// kernel: tpu_custom_call.1
$region0: #{tpu_custom_call.1}
  #allocation0 [shape = 'u32[]', space=smem, size = 0x4, offset = 0x4, fixed_abs, tag = 'smem constant byte address 0x4 - core index']
  #allocation1 [shape = 'u32[144,128]{1,0:T(1,128)}', space=vmem, size = 0x12000, scoped, tag = 'internal scratch']
  %s0 = inlined_call_operand.hbm [shape: f32[2,32,256], index: 0, kind: input, shape index: {}]
  %s1 = inlined_call_operand.vmem [shape: f32[2,32], index: 1, kind: input, shape index: {}]
  %s2 = inlined_call_operand.vmem [shape: f32[32,2], index: 2, kind: input, shape index: {}]
  %s3 = inlined_call_operand.vmem [shape: f32[2,32,1], index: 3, kind: output, shape index: {}]
  %s4 = sld [smem:[#allocation0]]
  $region49: #{tpu_custom_call.1} parent=0
    _
  %s6 = ssub.s32 1, %s4
  %s7 = scalar_select 0, %s6, %s4
  $region1: #{tpu_custom_call.1} parent=0
    #allocation2 [shape = 'u8[65536]{0}', space=vmem, size = 0x10000, scoped, tag = 'input window, operand 0']
    #allocation3 [shape = 's32[2]{0}', space=sflag, size = 0x8, scoped, tag = 'scoped memory for tpu_custom_call.1']
    %8 = vsyncpa [#allocation3], 0
    %s9 = scalar_lea.sflag [#allocation3], 1
    %10 = vsyncpa %s9, 0
    loop: start=0, step=1, limit=4
    $region2: #{tpu_custom_call.1} parent=1 // loop_pre_header
      _
    $region3: #{tpu_custom_call.1} parent=1 // loop_header
      %s12 = sphi 0, %s16
      %p13 = scmp.ge.s32.totalorder %s12, 4
      %s19 = sphi 0, %s31
      %s20 = sphi 0, %s27
      %s21 = sphi 0, %s19
      %s22 = sphi 0, %s20
      %s23 = sphi 0, %s21
      %s24 = sphi 0, %s22
      %s36 = sphi 0, %s38
      %s39 = sphi 0, %s36
      %s40 = sphi 0, %s39
      %s56 = sphi 0, %s40
      %s60 = sphi 0, %s60
      %s62 = sphi 0, %s60
      %s63 = sphi 0, %s62
      %s77 = sphi 0, %s63
      %s81 = sphi 0, %s81
      %s83 = sphi 0, %s81
      %s84 = sphi 0, %s83
      %s98 = sphi 0, %s84
      %s104 = sphi 0, %s106
      %s107 = sphi 0, %s104
      %s108 = sphi 0, %s107
      %s124 = sphi 0, %s108
    $region4: #{tpu_custom_call.1} parent=1 // loop_header_branch
      %15 = sbr.rel (%p13) target = $region8
    $region5: #{tpu_custom_call.1} parent=1 // loop_body
      %s17 = ssub.s32 %s12, 1
      %s18 = ssub.s32 %s12, 2
      %s25 = sadd.s32 1, %s20
      %p26 = scmp.ge.s32.totalorder %s25, 1
      %s27 = scalar_select %p26, 0, %s25
      %s28 = sadd.s32 1, %s19
      %s29 = scalar_select %p26, %s28, %s19
      %p30 = scmp.ge.s32.totalorder %s29, 2
      %s31 = scalar_select %p30, 0, %s29
      %s32 = ssub.s32 %s19, %s31
      %s33 = ssub.s32 %s20, %s27
      %s34 = sor.u32 %s32, %s33
      %p35 = scmp.eq.s32.totalorder %s34, 0
      %s37 = sadd.s32 %s36, 1
      %s38 = scalar_select %p35, %s36, %s37
      %p41 = pneg %p35
      %p42 = scmp.eq.s32.totalorder %s12, 1
      %p43 = por %p41, %p42
      %p44 = scmp.ne.s32.totalorder %s36, %s39
      %p45 = scmp.eq.s32.totalorder %s12, 0
      %p46 = por %p44, %p45
      %p47 = scmp.ne.s32.totalorder %s36, %s39
      %p48 = scmp.eq.s32.totalorder %s17, 1
      %p49 = por %p47, %p48
      %p50 = scmp.ne.s32.totalorder %s39, %s40
      %p51 = scmp.eq.s32.totalorder %s17, 0
      %p52 = por %p50, %p51
      %p53 = scmp.ne.s32.totalorder %s39, %s40
      %p54 = scmp.eq.s32.totalorder %s18, 1
      %p55 = por %p53, %p54
      %p57 = scmp.ne.s32.totalorder %s40, %s56
      %p58 = scmp.eq.s32.totalorder %s18, 0
      %p59 = por %p57, %p58
      %s61 = sadd.s32 %s60, 1
      %p64 = scmp.eq.s32.totalorder %s12, 1
      %p65 = scmp.ne.s32.totalorder %s60, %s62
      %p66 = scmp.eq.s32.totalorder %s12, 0
      %p67 = por %p65, %p66
      %p68 = scmp.ne.s32.totalorder %s60, %s62
      %p69 = scmp.eq.s32.totalorder %s17, 1
      %p70 = por %p68, %p69
      %p71 = scmp.ne.s32.totalorder %s62, %s63
      %p72 = scmp.eq.s32.totalorder %s17, 0
      %p73 = por %p71, %p72
      %p74 = scmp.ne.s32.totalorder %s62, %s63
      %p75 = scmp.eq.s32.totalorder %s18, 1
      %p76 = por %p74, %p75
      %p78 = scmp.ne.s32.totalorder %s63, %s77
      %p79 = scmp.eq.s32.totalorder %s18, 0
      %p80 = por %p78, %p79
      %s82 = sadd.s32 %s81, 1
      %p85 = scmp.eq.s32.totalorder %s12, 1
      %p86 = scmp.ne.s32.totalorder %s81, %s83
      %p87 = scmp.eq.s32.totalorder %s12, 0
      %p88 = por %p86, %p87
      %p89 = scmp.ne.s32.totalorder %s81, %s83
      %p90 = scmp.eq.s32.totalorder %s17, 1
      %p91 = por %p89, %p90
      %p92 = scmp.ne.s32.totalorder %s83, %s84
      %p93 = scmp.eq.s32.totalorder %s17, 0
      %p94 = por %p92, %p93
      %p95 = scmp.ne.s32.totalorder %s83, %s84
      %p96 = scmp.eq.s32.totalorder %s18, 1
      %p97 = por %p95, %p96
      %p99 = scmp.ne.s32.totalorder %s84, %s98
      %p100 = scmp.eq.s32.totalorder %s18, 0
      %p101 = por %p99, %p100
      %s102 = ssub.s32 %s19, %s31
      %p103 = scmp.eq.s32.totalorder %s102, 0
      %s105 = sadd.s32 %s104, 1
      %s106 = scalar_select %p103, %s104, %s105
      %p109 = pneg %p103
      %p110 = scmp.eq.s32.totalorder %s12, 1
      %p111 = por %p109, %p110
      %p112 = scmp.ne.s32.totalorder %s104, %s107
      %p113 = scmp.eq.s32.totalorder %s12, 0
      %p114 = por %p112, %p113
      %p115 = scmp.ne.s32.totalorder %s104, %s107
      %p116 = scmp.eq.s32.totalorder %s17, 1
      %p117 = por %p115, %p116
      %p118 = scmp.ne.s32.totalorder %s107, %s108
      %p119 = scmp.eq.s32.totalorder %s17, 0
      %p120 = por %p118, %p119
      %p121 = scmp.ne.s32.totalorder %s107, %s108
      %p122 = scmp.eq.s32.totalorder %s18, 1
      %p123 = por %p121, %p122
      %p125 = scmp.ne.s32.totalorder %s108, %s124
      %p126 = scmp.eq.s32.totalorder %s18, 0
      %p127 = por %p125, %p126
      %p128 = scmp.le.s32.totalorder 1, %s12
      %p129 = scmp.lt.s32.totalorder %s12, 3
      %p130 = pnand %p128, %p129
      %p131 = pneg %p130
      // Predicated region
      $region9: #{tpu_custom_call.1} parent=5 // pred_check
        _
      $region10: #{tpu_custom_call.1} parent=5 // pred_check_branch
        %133 = sbr.rel (%p130) target = $region12
      $region11: #{tpu_custom_call.1} parent=5 // pred_region
        %s134 = ssub.s32 %s12, 1
        // Predicated region
        $region13: #{tpu_custom_call.1} parent=11 // pred_check
          %p135 = pneg %p73
        $region14: #{tpu_custom_call.1} parent=11 // pred_check_branch
          %137 = sbr.rel (%p135) target = $region16
        $region15: #{tpu_custom_call.1} parent=11 // pred_region
          _
        $region16: #{tpu_custom_call.1} parent=11 // pred_fallthru
          _
        // Predicated region
        $region17: #{tpu_custom_call.1} parent=11 // pred_check
          %p138 = pneg %p94
        $region18: #{tpu_custom_call.1} parent=11 // pred_check_branch
          %140 = sbr.rel (%p138) target = $region20
        $region19: #{tpu_custom_call.1} parent=11 // pred_region
          _
        $region20: #{tpu_custom_call.1} parent=11 // pred_fallthru
          _
      $region12: #{tpu_custom_call.1} parent=5 // pred_fallthru
        _
      %p141 = scmp.lt.s32.totalorder %s12, 2
      // Predicated region
      $region21: #{tpu_custom_call.1} parent=5 // pred_check
        %p142 = pneg %p141
      $region22: #{tpu_custom_call.1} parent=5 // pred_check_branch
        %144 = sbr.rel (%p142) target = $region24
      $region23: #{tpu_custom_call.1} parent=5 // pred_region
        // Predicated region
        $region25: #{tpu_custom_call.1} parent=23 // pred_check
          %p145 = pneg %p46
        $region26: #{tpu_custom_call.1} parent=23 // pred_check_branch
          %147 = sbr.rel (%p145) target = $region28
        $region27: #{tpu_custom_call.1} parent=23 // pred_region
          %s148 = sand.u32 %s36, 1
          %s149 = scalar_lea.sflag [#allocation3], %s148
          %s150 = sand.u32 %s36, 1
          %s151 = smul.addr %s150, 64
          %s152 = scalar_lea.vmem [#allocation2], %s151
          %s153 = smul.u32 2, %s20
          %s155 = ssub.s32 1024, 1024
          %156 = vsyncadd %s149, %s155
          %s157 = smul.addr %s19, 8
          %s158 = sadd.s32 %s153, %s157
          %s159 = smul.addr %s158, 128
          %s160 = scalar_lea.hbm %s0, %s159
          %s161 = sshll.u32 %s152, 4
          %s162 = int_to_ptr.vmem [resolvable:$true] %s161
          %167 = dma.hbm_to_vmem [thread:$0]  %s160, 1024, %s162, %s149, 256, 256, 16
        $region28: #{tpu_custom_call.1} parent=23 // pred_fallthru
          _
      $region24: #{tpu_custom_call.1} parent=5 // pred_fallthru
        _
      %p168 = scmp.le.s32.totalorder 1, %s12
      %p169 = scmp.lt.s32.totalorder %s12, 3
      %p170 = pnand %p168, %p169
      %p171 = pneg %p170
      // Predicated region
      $region29: #{tpu_custom_call.1} parent=5 // pred_check
        _
      $region30: #{tpu_custom_call.1} parent=5 // pred_check_branch
        %173 = sbr.rel (%p170) target = $region32
      $region31: #{tpu_custom_call.1} parent=5 // pred_region
        %s174 = ssub.s32 %s12, 1
        %s175 = sand.u32 %s39, 1
        %s176 = scalar_lea.sflag [#allocation3], %s175
        %s177 = sand.u32 %s39, 1
        %s178 = smul.addr %s177, 64
        %s179 = scalar_lea.vmem [#allocation2], %s178
        // Predicated region
        $region33: #{tpu_custom_call.1} parent=31 // pred_check
          %p180 = pneg %p52
        $region34: #{tpu_custom_call.1} parent=31 // pred_check_branch
          %182 = sbr.rel (%p180) target = $region36
        $region35: #{tpu_custom_call.1} parent=31 // pred_region
          %183 = dma.done %s176, 1024
        $region36: #{tpu_custom_call.1} parent=31 // pred_fallthru
          _
        %s184 = sand.u32 %s39, 1
        %s185 = scalar_lea.sflag [#allocation3], %s184
        %s186 = sand.u32 %s39, 1
        %s187 = smul.addr %s186, 64
        %s188 = scalar_lea.vmem [#allocation2], %s187
        %p189 = pneg %p52
        %p190 = pneg %p49
        %p191 = pneg %p73
        %p192 = pneg %p70
        %p193 = pneg %p94
        %p194 = pneg %p91
        %p195 = pneg %p120
        %p196 = pneg %p117
        %p197 = scmp.lt.s32.totalorder %s21, 1
        %s198 = scalar_select %p197, %s21, 1
        %s199 = smul.addr %s198, 4
        %s200 = smul.addr %s199, 8
        %s201 = scalar_lea.vmem %s3, %s200
        %s202 = smul.u32 2, %s22
        %p203 = scmp.lt.s32.totalorder %s21, 1
        %s204 = scalar_select %p203, %s21, 1
        %s205 = smul.addr %s204, 4
        %s206 = smul.addr %s205, 8
        %s207 = scalar_lea.vmem %s3, %s206
        %v208 = vld [vmem:[%s179] sm:$0xff]
        %v209 = vld [vmem:[%s179 + $0x8] sm:$0xff]
        %v210 = vld [vmem:[%s179 + $0x10] sm:$0xff]
        %v211 = vld [vmem:[%s179 + $0x18] sm:$0xff]
        %v212 = vld [vmem:[%s179 + $0x20] sm:$0xff]
        %v213 = vld [vmem:[%s179 + $0x28] sm:$0xff]
        %v214 = vld [vmem:[%s179 + $0x30] sm:$0xff]
        %v215 = vld [vmem:[%s179 + $0x38] sm:$0xff]
        %v216 = vadd.f32 %v208, %v209
        %217 = vadd.xlane.f32.xlu0 %v216
        %v218 = vpop.xlane.xlu0 %217
        %v219 = vadd.f32 %v210, %v211
        %220 = vadd.xlane.f32.xlu0 %v219
        %v221 = vpop.xlane.xlu0 %220
        %v222 = vadd.f32 %v212, %v213
        %223 = vadd.xlane.f32.xlu0 %v222
        %v224 = vpop.xlane.xlu0 %223
        %v225 = vadd.f32 %v214, %v215
        %226 = vadd.xlane.f32.xlu0 %v225
        %v227 = vpop.xlane.xlu0 %226
        %v228 = vmax.f32 %v208, %v209
        %229 = vmax.xlane.f32.xlu0 %v228
        %v230 = vpop.xlane.xlu0 %229
        %v231 = vmax.f32 %v210, %v211
        %232 = vmax.xlane.f32.xlu0 %v231
        %v233 = vpop.xlane.xlu0 %232
        %v234 = vmax.f32 %v212, %v213
        %235 = vmax.xlane.f32.xlu0 %v234
        %v236 = vpop.xlane.xlu0 %235
        %v237 = vmax.f32 %v214, %v215
        %238 = vmax.xlane.f32.xlu0 %v237
        %v239 = vpop.xlane.xlu0 %238
        %v240 = vmul.f32 %v218, 0.00390625
        %v241 = vmul.f32 %v221, 0.00390625
        %v242 = vmul.f32 %v224, 0.00390625
        %v243 = vmul.f32 %v227, 0.00390625
        %v244 = vlaneseq
        %v245 = vand.u32 %v244, 127
        %vm246 = vcmp.eq.s32.totalorder %v245, 0
        %v247 = vsel %vm246, 1, 0
        %vm248 = vcmp.eq.s32.totalorder %v247, 1
        %v249 = vsel %vm248, %v240, %v230
        %v250 = vsel %vm248, %v241, %v233
        %v251 = vsel %vm248, %v242, %v236
        %v252 = vsel %vm248, %v243, %v239
        %v253 = vld [vmem:[%s1] sm:$0x3]
        %vm254 = vcmask 261120
        %v256 = vsel %vm254, %v253, 0
        %258 = vmatprep.subr.mxu0 0.0
        %259 = vmatpush1.msra.mxu0 %v249
        %260 = vmatprep.subr.mxu0 0.0
        %261 = vmatpush1.msra.mxu0 %v250
        %262 = vmatprep.subr.mxu0 0.0
        %263 = vmatpush1.msra.mxu0 %v251
        %264 = vmatprep.subr.mxu0 0.0
        %265 = vmatpush1.msra.mxu0 %v252
        %266 = vmatprep.subr.mxu0 0.0
        %267 = vmatpush1.msra.mxu0 0.0
        %268 = vmatprep.subr.mxu0 0.0
        %269 = vmatpush1.msra.mxu0 0.0
        %270 = vmatprep.subr.mxu0 0.0
        %271 = vmatpush1.msra.mxu0 0.0
        %272 = vmatprep.subr.mxu0 0.0
        %273 = vmatpush1.msra.mxu0 0.0
        %274 = vmatprep.subr.mxu0 0.0
        %275 = vmatpush1.msra.mxu0 0.0
        %276 = vmatprep.subr.mxu0 0.0
        %277 = vmatpush1.msra.mxu0 0.0
        %278 = vmatprep.subr.mxu0 0.0
        %279 = vmatpush1.msra.mxu0 0.0
        %280 = vmatprep.subr.mxu0 0.0
        %281 = vmatpush1.msra.mxu0 0.0
        %282 = vmatprep.subr.mxu0 0.0
        %283 = vmatpush1.msra.mxu0 0.0
        %284 = vmatprep.subr.mxu0 0.0
        %285 = vmatpush1.msra.mxu0 0.0
        %286 = vmatprep.subr.mxu0 0.0
        %287 = vmatpush1.msra.mxu0 0.0
        %288 = vmatprep.subr.mxu0 0.0
        %289 = vmatpush1.msra.mxu0 0.0
        %290 = vmatprep.subr.mxu0 0.0
        %291 = vmatpush1.msra.mxu0 0.0
        %292 = vmatprep.subr.mxu0 0.0
        %293 = vmatpush1.msra.mxu0 0.0
        %294 = vmatprep.subr.mxu0 0.0
        %295 = vmatpush1.msra.mxu0 0.0
        %296 = vmatprep.subr.mxu0 0.0
        %297 = vmatpush1.msra.mxu0 0.0
        %298 = vmatprep.subr.mxu0 0.0
        %299 = vmatpush1.msra.mxu0 0.0
        %300 = vmatprep.subr.mxu0 0.0
        %301 = vmatpush1.msra.mxu0 0.0
        %302 = vmatprep.subr.mxu0 0.0
        %303 = vmatpush1.msra.mxu0 0.0
        %304 = vmatprep.subr.mxu0 0.0
        %305 = vmatpush1.msra.mxu0 0.0
        %306 = vmatprep.subr.mxu0 0.0
        %307 = vmatpush1.msra.mxu0 0.0
        %308 = vmatprep.subr.mxu0 0.0
        %309 = vmatpush1.msra.mxu0 0.0
        %310 = vmatprep.subr.mxu0 0.0
        %311 = vmatpush1.msra.mxu0 0.0
        %312 = vmatprep.subr.mxu0 0.0
        %313 = vmatpush1.msra.mxu0 0.0
        %314 = vmatprep.subr.mxu0 0.0
        %315 = vmatpush1.msra.mxu0 0.0
        %316 = vmatprep.subr.mxu0 0.0
        %317 = vmatpush1.msra.mxu0 0.0
        %318 = vmatprep.subr.mxu0 0.0
        %319 = vmatpush1.msra.mxu0 0.0
        %320 = vmatprep.subr.mxu0 0.0
        %321 = vmatpush1.msra.mxu0 0.0
        %322 = vmatprep.mubr.f32.mxu0 0.0
        %323 = vmatmul.mubr.f32.gmra.mrb[0].mxu0 %v256
        %v324 = vpop.f32.mrb[0].mxu0
        %v325 = vadd.f32 0.0, %v324
        %v326 = vpop.f32.mrb[0].mxu0
        %327 = vdwg.mxu0
        %v328 = vmax.f32 %v325, 0.0
        %v329 = vld [vmem:[%s2] sm:$0xff]
        %v330 = vld [vmem:[%s2 + $0x8] sm:$0xff]
        %v331 = vld [vmem:[%s2 + $0x10] sm:$0xff]
        %v332 = vld [vmem:[%s2 + $0x18] sm:$0xff]
        %vm333 = vcmask 15360
        %v335 = vsel %vm333, %v329, 0
        %v338 = vsel %vm333, %v330, 0
        %v341 = vsel %vm333, %v331, 0
        %v344 = vsel %vm333, %v332, 0
        %vm346 = vcmask 1041408
        %v348 = vsel %vm346, %v328, 0
        %350 = vmatprep.subr.mxu0 0.0
        %351 = vmatpush1.msra.mxu0 %v348
        %352 = vmatprep.subr.mxu0 0.0
        %353 = vmatpush1.msra.mxu0 0.0
        %354 = vmatprep.subr.mxu0 0.0
        %355 = vmatpush1.msra.mxu0 0.0
        %356 = vmatprep.subr.mxu0 0.0
        %357 = vmatpush1.msra.mxu0 0.0
        %358 = vmatprep.subr.mxu0 0.0
        %359 = vmatpush1.msra.mxu0 0.0
        %360 = vmatprep.subr.mxu0 0.0
        %361 = vmatpush1.msra.mxu0 0.0
        %362 = vmatprep.subr.mxu0 0.0
        %363 = vmatpush1.msra.mxu0 0.0
        %364 = vmatprep.subr.mxu0 0.0
        %365 = vmatpush1.msra.mxu0 0.0
        %366 = vmatprep.subr.mxu0 0.0
        %367 = vmatpush1.msra.mxu0 0.0
        %368 = vmatprep.subr.mxu0 0.0
        %369 = vmatpush1.msra.mxu0 0.0
        %370 = vmatprep.subr.mxu0 0.0
        %371 = vmatpush1.msra.mxu0 0.0
        %372 = vmatprep.subr.mxu0 0.0
        %373 = vmatpush1.msra.mxu0 0.0
        %374 = vmatprep.subr.mxu0 0.0
        %375 = vmatpush1.msra.mxu0 0.0
        %376 = vmatprep.subr.mxu0 0.0
        %377 = vmatpush1.msra.mxu0 0.0
        %378 = vmatprep.subr.mxu0 0.0
        %379 = vmatpush1.msra.mxu0 0.0
        %380 = vmatprep.subr.mxu0 0.0
        %381 = vmatpush1.msra.mxu0 0.0
        %382 = vmatprep.subr.mxu0 0.0
        %383 = vmatpush1.msra.mxu0 0.0
        %384 = vmatprep.subr.mxu0 0.0
        %385 = vmatpush1.msra.mxu0 0.0
        %386 = vmatprep.subr.mxu0 0.0
        %387 = vmatpush1.msra.mxu0 0.0
        %388 = vmatprep.subr.mxu0 0.0
        %389 = vmatpush1.msra.mxu0 0.0
        %390 = vmatprep.subr.mxu0 0.0
        %391 = vmatpush1.msra.mxu0 0.0
        %392 = vmatprep.subr.mxu0 0.0
        %393 = vmatpush1.msra.mxu0 0.0
        %394 = vmatprep.subr.mxu0 0.0
        %395 = vmatpush1.msra.mxu0 0.0
        %396 = vmatprep.subr.mxu0 0.0
        %397 = vmatpush1.msra.mxu0 0.0
        %398 = vmatprep.subr.mxu0 0.0
        %399 = vmatpush1.msra.mxu0 0.0
        %400 = vmatprep.subr.mxu0 0.0
        %401 = vmatpush1.msra.mxu0 0.0
        %402 = vmatprep.subr.mxu0 0.0
        %403 = vmatpush1.msra.mxu0 0.0
        %404 = vmatprep.subr.mxu0 0.0
        %405 = vmatpush1.msra.mxu0 0.0
        %406 = vmatprep.subr.mxu0 0.0
        %407 = vmatpush1.msra.mxu0 0.0
        %408 = vmatprep.subr.mxu0 0.0
        %409 = vmatpush1.msra.mxu0 0.0
        %410 = vmatprep.subr.mxu0 0.0
        %411 = vmatpush1.msra.mxu0 0.0
        %412 = vmatprep.subr.mxu0 0.0
        %413 = vmatpush1.msra.mxu0 0.0
        %414 = vmatprep.mubr.f32.mxu0 0.0
        %415 = vmatmul.mubr.f32.gmra.mrb[0].mxu0 %v335
        %v416 = vpop.f32.mrb[0].mxu0
        %v417 = vadd.f32 0.0, %v416
        %v418 = vpop.f32.mrb[0].mxu0
        %419 = vmatprep.mubr.f32.mxu0 0.0
        %420 = vmatmul.mubr.f32.gmra.mrb[0].mxu0 %v338
        %v421 = vpop.f32.mrb[0].mxu0
        %v422 = vadd.f32 0.0, %v421
        %v423 = vpop.f32.mrb[0].mxu0
        %424 = vmatprep.mubr.f32.mxu0 0.0
        %425 = vmatmul.mubr.f32.gmra.mrb[0].mxu0 %v341
        %v426 = vpop.f32.mrb[0].mxu0
        %v427 = vadd.f32 0.0, %v426
        %v428 = vpop.f32.mrb[0].mxu0
        %429 = vmatprep.mubr.f32.mxu0 0.0
        %430 = vmatmul.mubr.f32.gmra.mrb[0].mxu0 %v344
        %v431 = vpop.f32.mrb[0].mxu0
        %v432 = vadd.f32 0.0, %v431
        %v433 = vpop.f32.mrb[0].mxu0
        %434 = vdwg.mxu0
        %439 = vrot.lane.b32.xlu0 %v417, 127
        %v440 = vpop.permute.xlu0 %439
        %441 = vrot.lane.b32.xlu0 %v422, 127
        %v442 = vpop.permute.xlu0 %441
        %443 = vrot.lane.b32.xlu0 %v427, 127
        %v444 = vpop.permute.xlu0 %443
        %445 = vrot.lane.b32.xlu0 %v432, 127
        %v446 = vpop.permute.xlu0 %445
        %v451 = vadd.f32 %v417, %v440
        %v452 = vadd.f32 %v422, %v442
        %v453 = vadd.f32 %v427, %v444
        %v454 = vadd.f32 %v432, %v446
        %v455 = vxor.u32 %v451, 2147483648
        %v456 = vxor.u32 %v452, 2147483648
        %v457 = vxor.u32 %v453, 2147483648
        %v458 = vxor.u32 %v454, 2147483648
        %v459 = vmul.f32 %v455, 1.442695
        %v460 = vpow.pop %v459
        %v461 = vmul.f32 %v456, 1.442695
        %v462 = vpow.pop %v461
        %v463 = vmul.f32 %v457, 1.442695
        %v464 = vpow.pop %v463
        %v465 = vmul.f32 %v458, 1.442695
        %v466 = vpow.pop %v465
        %v467 = vadd.f32 %v460, 1.0
        %v468 = vadd.f32 %v462, 1.0
        %v469 = vadd.f32 %v464, 1.0
        %v470 = vadd.f32 %v466, 1.0
        %v471 = vrcp.pop %v467
        %v472 = vmul.f32 1.0, %v471
        %v473 = vrcp.pop %v468
        %v474 = vmul.f32 1.0, %v473
        %v475 = vrcp.pop %v469
        %v476 = vmul.f32 1.0, %v475
        %v477 = vrcp.pop %v470
        %v478 = vmul.f32 1.0, %v477
        %vm479 = vcmask 7168
        %480 = vst.msk [vmem:[%s207] sm:$0xff] %vm479, %v472
        %481 = vst.msk [vmem:[%s207 + $0x8] sm:$0xff] %vm479, %v474
        %482 = vst.msk [vmem:[%s207 + $0x10] sm:$0xff] %vm479, %v476
        %483 = vst.msk [vmem:[%s207 + $0x18] sm:$0xff] %vm479, %v478
        %p484 = scmp.lt.s32.totalorder %s21, 1
        %s485 = scalar_select %p484, %s21, 1
        %s486 = smul.addr %s485, 4
        %s487 = smul.addr %s486, 8
        %s488 = scalar_lea.vmem %s3, %s487
        // Predicated region
        $region37: #{tpu_custom_call.1} parent=31 // pred_check
          %p489 = pneg %p117
        $region38: #{tpu_custom_call.1} parent=31 // pred_check_branch
          %491 = sbr.rel (%p489) target = $region40
        $region39: #{tpu_custom_call.1} parent=31 // pred_region
          _
        $region40: #{tpu_custom_call.1} parent=31 // pred_fallthru
          _
      $region32: #{tpu_custom_call.1} parent=5 // pred_fallthru
        _
      %p492 = scmp.le.s32.totalorder 2, %s12
      // Predicated region
      $region41: #{tpu_custom_call.1} parent=5 // pred_check
        %p493 = pneg %p492
      $region42: #{tpu_custom_call.1} parent=5 // pred_check_branch
        %495 = sbr.rel (%p493) target = $region44
      $region43: #{tpu_custom_call.1} parent=5 // pred_region
        %s496 = ssub.s32 %s12, 2
        // Predicated region
        $region45: #{tpu_custom_call.1} parent=43 // pred_check
          %p497 = pneg %p123
        $region46: #{tpu_custom_call.1} parent=43 // pred_check_branch
          %499 = sbr.rel (%p497) target = $region48
        $region47: #{tpu_custom_call.1} parent=43 // pred_region
          %p500 = scmp.lt.s32.totalorder %s23, 1
          %s501 = scalar_select %p500, %s23, 1
          %s502 = smul.addr %s501, 4
          %s503 = smul.addr %s502, 8
          %s504 = scalar_lea.vmem %s3, %s503
        $region48: #{tpu_custom_call.1} parent=43 // pred_fallthru
          _
      $region44: #{tpu_custom_call.1} parent=5 // pred_fallthru
        _
    $region6: #{tpu_custom_call.1} parent=1 // loop_footer
      %s16 = sadd.s32 1, %s12
    $region7: #{tpu_custom_call.1} parent=1 // loop_footer_branch
      %11 = sbr.rel target = $region3
    $region8: #{tpu_custom_call.1} parent=1 // loop_exit
      _
    %505 = vsyncpa [#allocation3], 1
    %s506 = scalar_lea.sflag [#allocation3], 1
    %507 = vsyncpa %s506, 1

</llo_original>
